<compile_context>
chip_gen: v7x
topology: tpu7x:2x2x1
jax: 0.10.0
libtpu: 0.0.40
codegen_flags: <defaults>
</compile_context>

<pallas_src>
import functools

import jax
import jax.numpy as jnp
from jax.experimental import pallas as pl
from jax.experimental.pallas import tpu as pltpu

_LANES = 128
_BLOCK_BYTES = 4 * 1024 * 1024   # per-input block byte budget
_NUM_CORES = 2                   # engages both TensorCores on v7x; harmless on v5e/v6e
_FOLD = 64                       # accumulator rows per core (8 f32 vregs)
_VMEM_LIMIT = 40 * 1024 * 1024   # inside v7x's 64 MiB physical VMEM with headroom


def _mse_kernel(x_ref, t_ref, o_ref, *, row_tile, rows_total, bpc, fold, need_mask):
    p = pl.program_id(0)   # "parallel" core-split axis
    j = pl.program_id(1)   # "arbitrary" reduction axis

    @pl.when(j == 0)
    def _init():
        o_ref[...] = jnp.zeros_like(o_ref)

    def _sq_diff():
        d = x_ref[...].astype(jnp.float32) - t_ref[...].astype(jnp.float32)
        return d * d

    def _fold(dd):
        # (row_tile,128) -> (fold,128): fold//8 independent vreg add chains.
        return jnp.sum(dd.reshape(-1, fold, _LANES), axis=0)

    if not need_mask:
        o_ref[...] += _fold(_sq_diff())
    else:
        # Logical (UNclamped) first row of this block; rows past rows_total are
        # either edge padding or clamped duplicate blocks.
        row_start = (p * bpc + j) * row_tile

        @pl.when(row_start + row_tile <= rows_total)
        def _full_block():            # entirely real rows: mask-free fast path
            o_ref[...] += _fold(_sq_diff())

        @pl.when((row_start < rows_total) & (row_start + row_tile > rows_total))
        def _edge_block():            # the single straddling block: mask padding
            dd = _sq_diff()
            rid = jax.lax.broadcasted_iota(jnp.int32, dd.shape, 0) + row_start
            # jnp.where is a lane select -> padded NaN/Inf garbage can't leak.
            dd = jnp.where(rid < rows_total, dd, jnp.float32(0.0))
            o_ref[...] += _fold(dd)
        # Fully out-of-range (clamped duplicate) blocks: no compute at all.


def _clamp_64bit(a):
    # TPUs have no native 64-bit path; clamp f64/i64 to f32. Accumulation is
    # f32, so very large N drifts slightly vs. torch's double-precision mean.
    if jnp.dtype(a.dtype).itemsize > 4:
        return a.astype(jnp.float32)
    return a


def mse_loss(x, t):
    assert x.shape == t.shape, "MSELoss requires matching shapes (no broadcast here)"
    n = x.size
    xf = jnp.ravel(_clamp_64bit(x))   # native dtype kept; reshape is free
    tf = jnp.ravel(_clamp_64bit(t))

    x_item = jnp.dtype(xf.dtype).itemsize
    t_item = jnp.dtype(tf.dtype).itemsize
    # Sublane layout quantum of the NARROWER dtype: f32->8, bf16->16, int8->32.
    q = 8 * (4 // min(x_item, t_item))

    rows_total = n // _LANES
    lane_tail = n - rows_total * _LANES

    if rows_total < q:
        # Too small for a legal TPU tile; exact & cheap jnp fallback.
        df = xf.astype(jnp.float32) - tf.astype(jnp.float32)
        return jnp.sum(df * df) / jnp.float32(n)

    # Byte-budgeted rows per block (sized by the wider input so neither block
    # exceeds the budget), rounded down to lcm(q, _FOLD) == 64 when possible.
    budget_rows = _BLOCK_BYTES // (_LANES * max(x_item, t_item))
    align = _FOLD if rows_total >= _FOLD else q
    row_tile = max((min(budget_rows, rows_total) // align) * align, q)
    fold = _FOLD if row_tile % _FOLD == 0 else 8

    nblocks = pl.cdiv(rows_total, row_tile)
    P = _NUM_CORES
    bpc = pl.cdiv(nblocks, P)
    need_mask = (rows_total % row_tile != 0) or (P * bpc != nblocks)

    # Lane-dense (rows_total, 128) views in native dtype; the prefix slice is
    # only taken when n % 128 != 0.
    if lane_tail:
        x2 = xf[: rows_total * _LANES].reshape(rows_total, _LANES)
        t2 = tf[: rows_total * _LANES].reshape(rows_total, _LANES)
    else:
        x2 = xf.reshape(rows_total, _LANES)
        t2 = tf.reshape(rows_total, _LANES)

    if P * bpc == nblocks:
        in_map = lambda p_, j_: (p_ * bpc + j_, 0)
    else:
        # Clamp trailing duplicate blocks onto the last real block; the kernel
        # skips them entirely (decision uses the UNclamped index).
        last = nblocks - 1
        in_map = lambda p_, j_: (jnp.minimum(p_ * bpc + j_, last), 0)

    kernel = functools.partial(
        _mse_kernel, row_tile=row_tile, rows_total=rows_total, bpc=bpc,
        fold=fold, need_mask=need_mask)

    partials = pl.pallas_call(
        kernel,
        out_shape=jax.ShapeDtypeStruct((P * fold, _LANES), jnp.float32),
        grid_spec=pltpu.PrefetchScalarGridSpec(
            num_scalar_prefetch=0,
            grid=(P, bpc),
            in_specs=[
                pl.BlockSpec((row_tile, _LANES), in_map),
                pl.BlockSpec((row_tile, _LANES), in_map),
            ],
            out_specs=pl.BlockSpec((fold, _LANES), lambda p_, j_: (p_, 0)),
        ),
        compiler_params=pltpu.CompilerParams(
            dimension_semantics=("parallel", "arbitrary"),
            vmem_limit_bytes=_VMEM_LIMIT,
        ),
        cost_estimate=pl.CostEstimate(
            flops=3 * n,
            transcendentals=0,
            bytes_accessed=n * (x_item + t_item) + P * fold * _LANES * 4),
    )(x2, t2)

    total = jnp.sum(partials)
    if lane_tail:
        xt = xf[rows_total * _LANES:].astype(jnp.float32)
        tt = tf[rows_total * _LANES:].astype(jnp.float32)
        total = total + jnp.sum((xt - tt) ** 2)
    return total / jnp.float32(n)


if __name__ == "__main__":
    key = jax.random.PRNGKey(0)
    k1, k2, k3, k4, k5, k6 = jax.random.split(key, 6)

    # Shapes consistent with an NCHW use of the module: batch=2, C=4, H=W=16.
    x = jax.random.normal(k1, (2, 4, 16, 16), dtype=jnp.float32)
    t = jax.random.normal(k2, (2, 4, 16, 16), dtype=jnp.float32)
    loss = mse_loss(x, t)
    jax.block_until_ready(loss)
    ref = jnp.mean((x - t) ** 2)
    assert jnp.allclose(loss, ref, rtol=1e-5, atol=1e-6), (loss, ref)

    # Ragged size: exercises the in-kernel edge mask and the <128 lane tail.
    xr = jax.random.normal(k3, (3, 5, 7, 11), dtype=jnp.float32)
    tr = jax.random.normal(k4, (3, 5, 7, 11), dtype=jnp.float32)
    loss_r = mse_loss(xr, tr)
    jax.block_until_ready(loss_r)
    ref_r = jnp.mean((xr - tr) ** 2)
    assert jnp.allclose(loss_r, ref_r, rtol=1e-5, atol=1e-6), (loss_r, ref_r)

    # Mixed dtype: native bf16 input vs f32 target (no wrapper-side promotion).
    xb = jax.random.normal(k5, (2, 8, 128), dtype=jnp.bfloat16)
    tb = jax.random.normal(k6, (2, 8, 128), dtype=jnp.float32)
    loss_b = mse_loss(xb, tb)
    jax.block_until_ready(loss_b)
    ref_b = jnp.mean((xb.astype(jnp.float32) - tb) ** 2)
    assert jnp.allclose(loss_b, ref_b, rtol=1e-5, atol=1e-6), (loss_b, ref_b)

    print("KERNEL_OK")
</pallas_src>

<mosaic_0001>
module attributes {stable_mosaic.version = 11 : i64} {
  func.func @_mse_kernel(%arg0: i32, %arg1: i32, %arg2: memref<16x128xf32, #tpu.memory_space<vmem>>, %arg3: memref<16x128xf32, #tpu.memory_space<vmem>>, %arg4: memref<8x128xf32, #tpu.memory_space<vmem>>) attributes {dimension_semantics = [#tpu.dimension_semantics<parallel>, #tpu.dimension_semantics<arbitrary>], iteration_bounds = array<i64: 2, 1>, scalar_prefetch = 0 : i64, scratch_operands = 0 : i64, tpu.core_type = #tpu.core_type<tc>, window_params = [{transform_indices = @transform_0, window_bounds = array<i64: 16, 128>}, {transform_indices = @transform_1, window_bounds = array<i64: 16, 128>}, {transform_indices = @transform_2, window_bounds = array<i64: 8, 128>}]} {
    %c0_i32 = arith.constant 0 : i32
    %0 = arith.cmpi eq, %arg1, %c0_i32 : i32
    %1 = arith.extui %0 : i1 to i32
    %c0_i32_0 = arith.constant 0 : i32
    %2 = arith.cmpi ne, %1, %c0_i32_0 : i32
    scf.if %2 {
      %cst = arith.constant 0.000000e+00 : f32
      %16 = vector.broadcast %cst : f32 to vector<8x128xf32>
      %c0 = arith.constant 0 : index
      %c0_8 = arith.constant 0 : index
      %17 = vector.load %arg4[%c0, %c0_8] : memref<8x128xf32, #tpu.memory_space<vmem>>, vector<8x128xf32>
      tpu.vector_store %arg4[%c0, %c0_8], %16 {strides = array<i32>} : memref<8x128xf32, #tpu.memory_space<vmem>>, vector<8x128xf32>,
    } else {
    }
    %c1_i32 = arith.constant 1 : i32
    %3 = arith.muli %arg0, %c1_i32 : i32
    %4 = arith.addi %3, %arg1 : i32
    %c16_i32 = arith.constant 16 : i32
    %5 = arith.muli %4, %c16_i32 : i32
    %c16_i32_1 = arith.constant 16 : i32
    %6 = arith.addi %5, %c16_i32_1 : i32
    %c16_i32_2 = arith.constant 16 : i32
    %7 = arith.cmpi sle, %6, %c16_i32_2 : i32
    %8 = arith.extui %7 : i1 to i32
    %c0_i32_3 = arith.constant 0 : i32
    %9 = arith.cmpi ne, %8, %c0_i32_3 : i32
    scf.if %9 {
      %c0 = arith.constant 0 : index
      %c0_8 = arith.constant 0 : index
      %16 = vector.load %arg4[%c0, %c0_8] : memref<8x128xf32, #tpu.memory_space<vmem>>, vector<8x128xf32>
      %c0_9 = arith.constant 0 : index
      %c0_10 = arith.constant 0 : index
      %17 = vector.load %arg2[%c0_9, %c0_10] : memref<16x128xf32, #tpu.memory_space<vmem>>, vector<16x128xf32>
      %c0_11 = arith.constant 0 : index
      %c0_12 = arith.constant 0 : index
      %18 = vector.load %arg3[%c0_11, %c0_12] : memref<16x128xf32, #tpu.memory_space<vmem>>, vector<16x128xf32>
      %19 = arith.subf %17, %18 : vector<16x128xf32>
      %20 = arith.mulf %19, %19 : vector<16x128xf32>
      %21 = vector.shape_cast %20 : vector<16x128xf32> to vector<2x8x128xf32>
      %cst = arith.constant dense<0.000000e+00> : vector<8x128xf32>
      %22 = vector.multi_reduction <add>, %21, %cst [0] : vector<2x8x128xf32> to vector<8x128xf32>
      %23 = arith.addf %16, %22 : vector<8x128xf32>
      %c0_13 = arith.constant 0 : index
      %c0_14 = arith.constant 0 : index
      %24 = vector.load %arg4[%c0_13, %c0_14] : memref<8x128xf32, #tpu.memory_space<vmem>>, vector<8x128xf32>
      tpu.vector_store %arg4[%c0_13, %c0_14], %23 {strides = array<i32>} : memref<8x128xf32, #tpu.memory_space<vmem>>, vector<8x128xf32>,
    } else {
    }
    %c16_i32_4 = arith.constant 16 : i32
    %10 = arith.cmpi slt, %5, %c16_i32_4 : i32
    %c16_i32_5 = arith.constant 16 : i32
    %11 = arith.addi %5, %c16_i32_5 : i32
    %c16_i32_6 = arith.constant 16 : i32
    %12 = arith.cmpi sgt, %11, %c16_i32_6 : i32
    %13 = arith.andi %10, %12 : i1
    %14 = arith.extui %13 : i1 to i32
    %c0_i32_7 = arith.constant 0 : i32
    %15 = arith.cmpi ne, %14, %c0_i32_7 : i32
    scf.if %15 {
      %c0 = arith.constant 0 : index
      %c0_8 = arith.constant 0 : index
      %16 = vector.load %arg2[%c0, %c0_8] : memref<16x128xf32, #tpu.memory_space<vmem>>, vector<16x128xf32>
      %c0_9 = arith.constant 0 : index
      %c0_10 = arith.constant 0 : index
      %17 = vector.load %arg3[%c0_9, %c0_10] : memref<16x128xf32, #tpu.memory_space<vmem>>, vector<16x128xf32>
      %18 = arith.subf %16, %17 : vector<16x128xf32>
      %19 = arith.mulf %18, %18 : vector<16x128xf32>
      %20 = tpu.iota {dimensions = array<i32: 0>} : vector<16x128xi32>
      %21 = vector.broadcast %5 : i32 to vector<16x128xi32>
      %22 = arith.addi %20, %21 : vector<16x128xi32>
      %c16_i32_11 = arith.constant 16 : i32
      %23 = vector.broadcast %c16_i32_11 : i32 to vector<16x128xi32>
      %24 = arith.cmpi slt, %22, %23 : vector<16x128xi32>
      %cst = arith.constant 0.000000e+00 : f32
      %25 = vector.broadcast %cst : f32 to vector<16x128xf32>
      %26 = arith.select %24, %19, %25 : vector<16x128xi1>, vector<16x128xf32>
      %c0_12 = arith.constant 0 : index
      %c0_13 = arith.constant 0 : index
      %27 = vector.load %arg4[%c0_12, %c0_13] : memref<8x128xf32, #tpu.memory_space<vmem>>, vector<8x128xf32>
      %28 = vector.shape_cast %26 : vector<16x128xf32> to vector<2x8x128xf32>
      %cst_14 = arith.constant dense<0.000000e+00> : vector<8x128xf32>
      %29 = vector.multi_reduction <add>, %28, %cst_14 [0] : vector<2x8x128xf32> to vector<8x128xf32>
      %30 = arith.addf %27, %29 : vector<8x128xf32>
      %c0_15 = arith.constant 0 : index
      %c0_16 = arith.constant 0 : index
      %31 = vector.load %arg4[%c0_15, %c0_16] : memref<8x128xf32, #tpu.memory_space<vmem>>, vector<8x128xf32>
      tpu.vector_store %arg4[%c0_15, %c0_16], %30 {strides = array<i32>} : memref<8x128xf32, #tpu.memory_space<vmem>>, vector<8x128xf32>,
    } else {
    }
    return
  }
  func.func @transform_0(%arg0: i32, %arg1: i32) -> (i32, i32) {
    %c1_i32 = arith.constant 1 : i32
    %0 = arith.muli %arg0, %c1_i32 : i32
    %1 = arith.addi %0, %arg1 : i32
    %c0_i32 = arith.constant 0 : i32
    %2 = arith.minsi %1, %c0_i32 : i32
    %c0_i32_0 = arith.constant 0 : i32
    %c0_i32_1 = arith.constant 0 : i32
    return %2, %c0_i32_0 : i32, i32
  }
  func.func @transform_1(%arg0: i32, %arg1: i32) -> (i32, i32) {
    %c1_i32 = arith.constant 1 : i32
    %0 = arith.muli %arg0, %c1_i32 : i32
    %1 = arith.addi %0, %arg1 : i32
    %c0_i32 = arith.constant 0 : i32
    %2 = arith.minsi %1, %c0_i32 : i32
    %c0_i32_0 = arith.constant 0 : i32
    %c0_i32_1 = arith.constant 0 : i32
    return %2, %c0_i32_0 : i32, i32
  }
  func.func @transform_2(%arg0: i32, %arg1: i32) -> (i32, i32) {
    %c0_i32 = arith.constant 0 : i32
    %c0_i32_0 = arith.constant 0 : i32
    return %arg0, %c0_i32 : i32, i32
  }
}

</mosaic_0001>

<llo_original>
// kernel: tpu_custom_call.1
$region0: #{tpu_custom_call.1}
  #allocation0 [shape = 'u32[]', space=smem, size = 0x4, offset = 0x4, fixed_abs, tag = 'smem constant byte address 0x4 - core index']
  #allocation1 [shape = 'u32[144,128]{1,0:T(1,128)}', space=vmem, size = 0x12000, scoped, tag = 'internal scratch']
  %s0 = inlined_call_operand.hbm [shape: f32[16,128], index: 0, kind: input, shape index: {}]
  %s1 = inlined_call_operand.hbm [shape: f32[16,128], index: 1, kind: input, shape index: {}]
  %s2 = inlined_call_operand.hbm [shape: f32[16,128], index: 2, kind: output, shape index: {}]
  %s3 = sld [smem:[#allocation0]]
  $region61: #{tpu_custom_call.1} parent=0
    _
  %s5 = ssub.s32 1, %s3
  %s6 = scalar_select 0, %s5, %s3
  $region1: #{tpu_custom_call.1} parent=0
    #allocation2 [shape = 'u8[16384]{0}', space=vmem, size = 0x4000, scoped, tag = 'input window, operand 0']
    #allocation3 [shape = 's32[2]{0}', space=sflag, size = 0x8, scoped, tag = 'scoped memory for tpu_custom_call.1']
    #allocation4 [shape = 's32[2]{0}', space=sflag, size = 0x8, scoped, tag = 'scoped memory for tpu_custom_call.1']
    #allocation5 [shape = 'u8[16384]{0}', space=vmem, size = 0x4000, scoped, tag = 'input window, operand 1']
    #allocation6 [shape = 's32[2]{0}', space=sflag, size = 0x8, scoped, tag = 'scoped memory for tpu_custom_call.1']
    #allocation7 [shape = 'u8[8192]{0}', space=vmem, size = 0x2000, scoped, tag = 'output window, operand 0']
    %7 = vsyncpa [#allocation3], 0
    %s8 = scalar_lea.sflag [#allocation3], 1
    %9 = vsyncpa %s8, 0
    %10 = vsyncpa [#allocation6], 0
    %s11 = scalar_lea.sflag [#allocation6], 1
    %12 = vsyncpa %s11, 0
    %13 = vsyncpa [#allocation4], 0
    %s14 = scalar_lea.sflag [#allocation4], 1
    %15 = vsyncpa %s14, 0
    loop: start=0, step=1, limit=4
    $region2: #{tpu_custom_call.1} parent=1 // loop_pre_header
      _
    $region3: #{tpu_custom_call.1} parent=1 // loop_header
      %s17 = sphi 0, %s21
      %p18 = scmp.ge.s32.totalorder %s17, 4
      %s24 = sphi 0, %s36
      %s25 = sphi 0, %s32
      %s26 = sphi 0, %s24
      %s27 = sphi 0, %s25
      %s28 = sphi 0, %s26
      %s29 = sphi 0, %s27
      %s45 = sphi 0, %s47
      %s48 = sphi 0, %s45
      %s49 = sphi 0, %s48
      %s65 = sphi 0, %s49
      %s77 = sphi 0, %s79
      %s80 = sphi 0, %s77
      %s81 = sphi 0, %s80
      %s97 = sphi 0, %s81
      %s103 = sphi 0, %s105
      %s106 = sphi 0, %s103
      %s107 = sphi 0, %s106
      %s123 = sphi 0, %s107
    $region4: #{tpu_custom_call.1} parent=1 // loop_header_branch
      %20 = sbr.rel (%p18) target = $region8
    $region5: #{tpu_custom_call.1} parent=1 // loop_body
      %s22 = ssub.s32 %s17, 1
      %s23 = ssub.s32 %s17, 2
      %s30 = sadd.s32 1, %s25
      %p31 = scmp.ge.s32.totalorder %s30, 1
      %s32 = scalar_select %p31, 0, %s30
      %s33 = sadd.s32 1, %s24
      %s34 = scalar_select %p31, %s33, %s24
      %p35 = scmp.ge.s32.totalorder %s34, 2
      %s36 = scalar_select %p35, 0, %s34
      %s37 = sadd.s32 %s24, %s25
      %p38 = scmp.lt.s32.totalorder %s37, 0
      %s39 = scalar_select %p38, %s37, 0
      %s40 = sadd.s32 %s36, %s32
      %p41 = scmp.lt.s32.totalorder %s40, 0
      %s42 = scalar_select %p41, %s40, 0
      %s43 = ssub.s32 %s39, %s42
      %p44 = scmp.eq.s32.totalorder %s43, 0
      %s46 = sadd.s32 %s45, 1
      %s47 = scalar_select %p44, %s45, %s46
      %p50 = pneg %p44
      %p51 = scmp.eq.s32.totalorder %s17, 1
      %p52 = por %p50, %p51
      %p53 = scmp.ne.s32.totalorder %s45, %s48
      %p54 = scmp.eq.s32.totalorder %s17, 0
      %p55 = por %p53, %p54
      %p56 = scmp.ne.s32.totalorder %s45, %s48
      %p57 = scmp.eq.s32.totalorder %s22, 1
      %p58 = por %p56, %p57
      %p59 = scmp.ne.s32.totalorder %s48, %s49
      %p60 = scmp.eq.s32.totalorder %s22, 0
      %p61 = por %p59, %p60
      %p62 = scmp.ne.s32.totalorder %s48, %s49
      %p63 = scmp.eq.s32.totalorder %s23, 1
      %p64 = por %p62, %p63
      %p66 = scmp.ne.s32.totalorder %s49, %s65
      %p67 = scmp.eq.s32.totalorder %s23, 0
      %p68 = por %p66, %p67
      %s69 = sadd.s32 %s24, %s25
      %p70 = scmp.lt.s32.totalorder %s69, 0
      %s71 = scalar_select %p70, %s69, 0
      %s72 = sadd.s32 %s36, %s32
      %p73 = scmp.lt.s32.totalorder %s72, 0
      %s74 = scalar_select %p73, %s72, 0
      %s75 = ssub.s32 %s71, %s74
      %p76 = scmp.eq.s32.totalorder %s75, 0
      %s78 = sadd.s32 %s77, 1
      %s79 = scalar_select %p76, %s77, %s78
      %p82 = pneg %p76
      %p83 = scmp.eq.s32.totalorder %s17, 1
      %p84 = por %p82, %p83
      %p85 = scmp.ne.s32.totalorder %s77, %s80
      %p86 = scmp.eq.s32.totalorder %s17, 0
      %p87 = por %p85, %p86
      %p88 = scmp.ne.s32.totalorder %s77, %s80
      %p89 = scmp.eq.s32.totalorder %s22, 1
      %p90 = por %p88, %p89
      %p91 = scmp.ne.s32.totalorder %s80, %s81
      %p92 = scmp.eq.s32.totalorder %s22, 0
      %p93 = por %p91, %p92
      %p94 = scmp.ne.s32.totalorder %s80, %s81
      %p95 = scmp.eq.s32.totalorder %s23, 1
      %p96 = por %p94, %p95
      %p98 = scmp.ne.s32.totalorder %s81, %s97
      %p99 = scmp.eq.s32.totalorder %s23, 0
      %p100 = por %p98, %p99
      %s101 = ssub.s32 %s24, %s36
      %p102 = scmp.eq.s32.totalorder %s101, 0
      %s104 = sadd.s32 %s103, 1
      %s105 = scalar_select %p102, %s103, %s104
      %p108 = pneg %p102
      %p109 = scmp.eq.s32.totalorder %s17, 1
      %p110 = por %p108, %p109
      %p111 = scmp.ne.s32.totalorder %s103, %s106
      %p112 = scmp.eq.s32.totalorder %s17, 0
      %p113 = por %p111, %p112
      %p114 = scmp.ne.s32.totalorder %s103, %s106
      %p115 = scmp.eq.s32.totalorder %s22, 1
      %p116 = por %p114, %p115
      %p117 = scmp.ne.s32.totalorder %s106, %s107
      %p118 = scmp.eq.s32.totalorder %s22, 0
      %p119 = por %p117, %p118
      %p120 = scmp.ne.s32.totalorder %s106, %s107
      %p121 = scmp.eq.s32.totalorder %s23, 1
      %p122 = por %p120, %p121
      %p124 = scmp.ne.s32.totalorder %s107, %s123
      %p125 = scmp.eq.s32.totalorder %s23, 0
      %p126 = por %p124, %p125
      %p127 = scmp.le.s32.totalorder 1, %s17
      %p128 = scmp.lt.s32.totalorder %s17, 3
      %p129 = pnand %p127, %p128
      %p130 = pneg %p129
      // Predicated region
      $region9: #{tpu_custom_call.1} parent=5 // pred_check
        _
      $region10: #{tpu_custom_call.1} parent=5 // pred_check_branch
        %132 = sbr.rel (%p129) target = $region12
      $region11: #{tpu_custom_call.1} parent=5 // pred_region
        %s133 = ssub.s32 %s17, 1
      $region12: #{tpu_custom_call.1} parent=5 // pred_fallthru
        _
      %p134 = scmp.lt.s32.totalorder %s17, 2
      // Predicated region
      $region13: #{tpu_custom_call.1} parent=5 // pred_check
        %p135 = pneg %p134
      $region14: #{tpu_custom_call.1} parent=5 // pred_check_branch
        %137 = sbr.rel (%p135) target = $region16
      $region15: #{tpu_custom_call.1} parent=5 // pred_region
        // Predicated region
        $region17: #{tpu_custom_call.1} parent=15 // pred_check
          %p138 = pneg %p55
        $region18: #{tpu_custom_call.1} parent=15 // pred_check_branch
          %140 = sbr.rel (%p138) target = $region20
        $region19: #{tpu_custom_call.1} parent=15 // pred_region
          %s141 = sand.u32 %s45, 1
          %s142 = scalar_lea.sflag [#allocation3], %s141
          %s143 = sand.u32 %s45, 1
          %s144 = smul.addr %s143, 16
          %s145 = scalar_lea.vmem [#allocation2], %s144
          %s146 = sadd.s32 %s24, %s25
          %p147 = scmp.lt.s32.totalorder %s146, 0
          %s148 = scalar_select %p147, %s146, 0
          %s149 = smul.u32 2, %s148
          %s151 = ssub.s32 256, 256
          %152 = vsyncadd %s142, %s151
          %s153 = smul.addr %s149, 128
          %s154 = scalar_lea.hbm %s0, %s153
          %s155 = sshll.u32 %s145, 4
          %s156 = int_to_ptr.vmem [resolvable:$true] %s155
          %161 = dma.hbm_to_vmem [thread:$0]  %s154, 256, %s156, %s142, 128, 128, 8
        $region20: #{tpu_custom_call.1} parent=15 // pred_fallthru
          _
        // Predicated region
        $region21: #{tpu_custom_call.1} parent=15 // pred_check
          %p162 = pneg %p87
        $region22: #{tpu_custom_call.1} parent=15 // pred_check_branch
          %164 = sbr.rel (%p162) target = $region24
        $region23: #{tpu_custom_call.1} parent=15 // pred_region
          %s165 = sand.u32 %s77, 1
          %s166 = scalar_lea.sflag [#allocation6], %s165
          %s167 = sand.u32 %s77, 1
          %s168 = smul.addr %s167, 16
          %s169 = scalar_lea.vmem [#allocation5], %s168
          %s170 = sadd.s32 %s24, %s25
          %p171 = scmp.lt.s32.totalorder %s170, 0
          %s172 = scalar_select %p171, %s170, 0
          %s173 = smul.u32 2, %s172
          %s175 = ssub.s32 256, 256
          %176 = vsyncadd %s166, %s175
          %s177 = smul.addr %s173, 128
          %s178 = scalar_lea.hbm %s1, %s177
          %s179 = sshll.u32 %s169, 4
          %s180 = int_to_ptr.vmem [resolvable:$true] %s179
          %185 = dma.hbm_to_vmem [thread:$0]  %s178, 256, %s180, %s166, 128, 128, 8
        $region24: #{tpu_custom_call.1} parent=15 // pred_fallthru
          _
      $region16: #{tpu_custom_call.1} parent=5 // pred_fallthru
        _
      %p186 = scmp.le.s32.totalorder 1, %s17
      %p187 = scmp.lt.s32.totalorder %s17, 3
      %p188 = pnand %p186, %p187
      %p189 = pneg %p188
      // Predicated region
      $region25: #{tpu_custom_call.1} parent=5 // pred_check
        _
      $region26: #{tpu_custom_call.1} parent=5 // pred_check_branch
        %191 = sbr.rel (%p188) target = $region28
      $region27: #{tpu_custom_call.1} parent=5 // pred_region
        %s192 = ssub.s32 %s17, 1
        %s193 = sand.u32 %s48, 1
        %s194 = scalar_lea.sflag [#allocation3], %s193
        %s195 = sand.u32 %s48, 1
        %s196 = smul.addr %s195, 16
        %s197 = scalar_lea.vmem [#allocation2], %s196
        // Predicated region
        $region29: #{tpu_custom_call.1} parent=27 // pred_check
          %p198 = pneg %p61
        $region30: #{tpu_custom_call.1} parent=27 // pred_check_branch
          %200 = sbr.rel (%p198) target = $region32
        $region31: #{tpu_custom_call.1} parent=27 // pred_region
          %201 = dma.done %s194, 256
        $region32: #{tpu_custom_call.1} parent=27 // pred_fallthru
          _
        %s202 = sand.u32 %s80, 1
        %s203 = scalar_lea.sflag [#allocation6], %s202
        %s204 = sand.u32 %s80, 1
        %s205 = smul.addr %s204, 16
        %s206 = scalar_lea.vmem [#allocation5], %s205
        // Predicated region
        $region33: #{tpu_custom_call.1} parent=27 // pred_check
          %p207 = pneg %p93
        $region34: #{tpu_custom_call.1} parent=27 // pred_check_branch
          %209 = sbr.rel (%p207) target = $region36
        $region35: #{tpu_custom_call.1} parent=27 // pred_region
          %210 = dma.done %s203, 256
        $region36: #{tpu_custom_call.1} parent=27 // pred_fallthru
          _
        %s211 = sand.u32 %s48, 1
        %s212 = scalar_lea.sflag [#allocation3], %s211
        %s213 = sand.u32 %s48, 1
        %s214 = smul.addr %s213, 16
        %s215 = scalar_lea.vmem [#allocation2], %s214
        %p216 = pneg %p61
        %p217 = pneg %p58
        %s218 = sand.u32 %s80, 1
        %s219 = scalar_lea.sflag [#allocation6], %s218
        %s220 = sand.u32 %s80, 1
        %s221 = smul.addr %s220, 16
        %s222 = scalar_lea.vmem [#allocation5], %s221
        %p223 = pneg %p93
        %p224 = pneg %p90
        %p225 = pneg %p119
        %p226 = pneg %p116
        %s227 = sand.u32 %s106, 1
        %s228 = scalar_lea.sflag [#allocation4], %s227
        %s229 = sand.u32 %s106, 1
        %s230 = smul.addr %s229, 8
        %s231 = scalar_lea.vmem [#allocation7], %s230
        %s232 = sadd.s32 %s26, %s27
        %p233 = scmp.lt.s32.totalorder %s232, 0
        %s234 = scalar_select %p233, %s232, 0
        %s235 = smul.u32 2, %s234
        %s236 = sadd.s32 %s26, %s27
        %p237 = scmp.lt.s32.totalorder %s236, 0
        %s238 = scalar_select %p237, %s236, 0
        %s239 = smul.u32 2, %s238
        %p240 = scmp.eq.s32.totalorder %s27, 0
        // Predicated region
        $region37: #{tpu_custom_call.1} parent=27 // pred_check
          %p241 = pneg %p240
        $region38: #{tpu_custom_call.1} parent=27 // pred_check_branch
          %243 = sbr.rel (%p241) target = $region40
        $region39: #{tpu_custom_call.1} parent=27 // pred_region
          %244 = vst [vmem:[%s231] sm:$0xff] 0.0
        $region40: #{tpu_custom_call.1} parent=27 // pred_fallthru
          _
        %s245 = sadd.s32 %s26, %s27
        %s246 = smul.u32 %s245, 16
        %s247 = sadd.s32 %s246, 16
        %p248 = scmp.le.s32.totalorder %s247, 16
        // Predicated region
        $region41: #{tpu_custom_call.1} parent=27 // pred_check
          %p249 = pneg %p248
        $region42: #{tpu_custom_call.1} parent=27 // pred_check_branch
          %251 = sbr.rel (%p249) target = $region44
        $region43: #{tpu_custom_call.1} parent=27 // pred_region
          %v252 = vld [vmem:[%s231] sm:$0xff]
          %v253 = vld [vmem:[%s197] sm:$0xff]
          %v254 = vld [vmem:[%s197 + $0x8] sm:$0xff]
          %v255 = vld [vmem:[%s206] sm:$0xff]
          %v256 = vld [vmem:[%s206 + $0x8] sm:$0xff]
          %v257 = vsub.f32 %v253, %v255
          %v258 = vsub.f32 %v254, %v256
          %v259 = vmul.f32 %v257, %v257
          %v260 = vmul.f32 %v258, %v258
          %v261 = vadd.f32 %v259, %v260
          %v262 = vadd.f32 %v252, %v261
          %263 = vst [vmem:[%s231] sm:$0xff] %v262
        $region44: #{tpu_custom_call.1} parent=27 // pred_fallthru
          _
        %p264 = scmp.lt.s32.totalorder %s246, 16
        %p265 = scmp.gt.s32.totalorder %s247, 16
        %p266 = pnand %p264, %p265
        %p267 = pneg %p266
        // Predicated region
        $region45: #{tpu_custom_call.1} parent=27 // pred_check
          _
        $region46: #{tpu_custom_call.1} parent=27 // pred_check_branch
          %269 = sbr.rel (%p266) target = $region48
        $region47: #{tpu_custom_call.1} parent=27 // pred_region
          %v270 = vld [vmem:[%s197] sm:$0xff]
          %v271 = vld [vmem:[%s197 + $0x8] sm:$0xff]
          %v272 = vld [vmem:[%s206] sm:$0xff]
          %v273 = vld [vmem:[%s206 + $0x8] sm:$0xff]
          %v274 = vsub.f32 %v270, %v272
          %v275 = vsub.f32 %v271, %v273
          %v276 = vmul.f32 %v274, %v274
          %v277 = vmul.f32 %v275, %v275
          %v278 = vlaneseq
          %v279 = vshrl.u32 %v278, 7
          %v280 = vadd.s32 %v279, 8
          %v281 = vstv %s246
          %v282 = vadd.s32 %v279, %v281
          %v283 = vadd.s32 %v280, %v281
          %vm284 = vcmp.lt.s32.totalorder %v282, 16
          %vm285 = vcmp.lt.s32.totalorder %v283, 16
          %v286 = vsel %vm284, %v276, 0.0
          %v287 = vsel %vm285, %v277, 0.0
          %v288 = vld [vmem:[%s231] sm:$0xff]
          %v289 = vadd.f32 %v286, %v287
          %v290 = vadd.f32 %v288, %v289
          %291 = vst [vmem:[%s231] sm:$0xff] %v290
        $region48: #{tpu_custom_call.1} parent=27 // pred_fallthru
          _
        %s292 = sand.u32 %s106, 1
        %s293 = scalar_lea.sflag [#allocation4], %s292
        %s294 = sand.u32 %s106, 1
        %s295 = smul.addr %s294, 8
        %s296 = scalar_lea.vmem [#allocation7], %s295
        // Predicated region
        $region49: #{tpu_custom_call.1} parent=27 // pred_check
          %p297 = pneg %p116
        $region50: #{tpu_custom_call.1} parent=27 // pred_check_branch
          %299 = sbr.rel (%p297) target = $region52
        $region51: #{tpu_custom_call.1} parent=27 // pred_region
          %s301 = ssub.s32 128, 128
          %302 = vsyncadd %s293, %s301
          %s303 = smul.addr %s26, 128
          %s304 = scalar_lea.hbm %s2, %s303
          %s306 = sshll.u32 %s296, 4
          %s307 = int_to_ptr.vmem [resolvable:$true] %s306
          %309 = dma.vmem_to_hbm [thread:$0]  %s307, 128, %s304, %s293
        $region52: #{tpu_custom_call.1} parent=27 // pred_fallthru
          _
      $region28: #{tpu_custom_call.1} parent=5 // pred_fallthru
        _
      %p310 = scmp.le.s32.totalorder 2, %s17
      // Predicated region
      $region53: #{tpu_custom_call.1} parent=5 // pred_check
        %p311 = pneg %p310
      $region54: #{tpu_custom_call.1} parent=5 // pred_check_branch
        %313 = sbr.rel (%p311) target = $region56
      $region55: #{tpu_custom_call.1} parent=5 // pred_region
        %s314 = ssub.s32 %s17, 2
        // Predicated region
        $region57: #{tpu_custom_call.1} parent=55 // pred_check
          %p315 = pneg %p122
        $region58: #{tpu_custom_call.1} parent=55 // pred_check_branch
          %317 = sbr.rel (%p315) target = $region60
        $region59: #{tpu_custom_call.1} parent=55 // pred_region
          %s318 = sand.u32 %s107, 1
          %s319 = scalar_lea.sflag [#allocation4], %s318
          %s320 = sand.u32 %s107, 1
          %s321 = smul.addr %s320, 8
          %s322 = scalar_lea.vmem [#allocation7], %s321
          %323 = dma.done %s319, 128
        $region60: #{tpu_custom_call.1} parent=55 // pred_fallthru
          _
      $region56: #{tpu_custom_call.1} parent=5 // pred_fallthru
        _
    $region6: #{tpu_custom_call.1} parent=1 // loop_footer
      %s21 = sadd.s32 1, %s17
    $region7: #{tpu_custom_call.1} parent=1 // loop_footer_branch
      %16 = sbr.rel target = $region3
    $region8: #{tpu_custom_call.1} parent=1 // loop_exit
      _
    %324 = vsyncpa [#allocation3], 1
    %s325 = scalar_lea.sflag [#allocation3], 1
    %326 = vsyncpa %s325, 1
    %327 = vsyncpa [#allocation6], 1
    %s328 = scalar_lea.sflag [#allocation6], 1
    %329 = vsyncpa %s328, 1
    %330 = vsyncpa [#allocation4], 1
    %s331 = scalar_lea.sflag [#allocation4], 1
    %332 = vsyncpa %s331, 1

</llo_original>
